<compile_context>
chip_gen: v6e
topology: v6e:2x2x1
jax: 0.10.0
libtpu: 0.0.40
codegen_flags: <defaults>
</compile_context>

<pallas_src>
import jax
import jax.numpy as jnp
from jax.experimental import pallas as pl
from jax.experimental.pallas import tpu as pltpu

LANE = 128     # TPU lane width
SUBLANE = 8


def _round_up(n, m):
    return ((n + m - 1) // m) * m


def dqn_kernel(x_ref, w1_ref, b1_ref, w2_ref, b2_ref, w3t_ref, b3_ref, out_ref):
    # fc1 + relu: bf16 MXU matmul (small, un-padded K = input_size), f32 accumulation,
    # bias + ReLU in f32 on the VPU.
    h1 = jnp.dot(x_ref[...], w1_ref[...], preferred_element_type=jnp.float32)
    h1 = jnp.maximum(h1 + b1_ref[...], 0.0)
    # fc2 + relu
    h2 = jnp.dot(h1.astype(jnp.bfloat16), w2_ref[...],
                 preferred_element_type=jnp.float32)
    h2 = jnp.maximum(h2 + b2_ref[...], 0.0)
    # fc3, computed transposed so the HBM store is lane-dense:
    #   out_t[o, t] = sum_d w3t[o, d] * h2[t, d]
    out_t = jax.lax.dot_general(
        w3t_ref[...], h2.astype(jnp.bfloat16),
        dimension_numbers=(((1,), (1,)), ((), ())),
        preferred_element_type=jnp.float32)
    out_ref[...] = (out_t + b3_ref[...]).astype(out_ref.dtype)
    # TODO(synk): epsilon-greedy / argmax action selection could be fused here to emit
    # one int32 per row when only actions (not Q-values) are needed downstream.


def dqn_forward(x, params, output_size, *, tile_b=4096):
    """Fused 3-layer MLP. x: [batch, input_size] f32 -> [batch, output_size] f32."""
    w1, b1, w2, b2, w3t, b3 = params
    in_dim = w1.shape[0]          # un-padded input feature dim
    out_rows = w3t.shape[0]       # output_size rounded up to 8 sublanes
    batch = x.shape[0]
    assert x.shape[1] == in_dim

    # Batch tiling.  Constraints: tile % 8 == 0 (input sublane dim) and, because the
    # transposed output puts batch on the lane axis, tile % 128 == 0 unless one tile
    # covers the whole (padded) batch.
    pb0 = _round_up(max(batch, SUBLANE), SUBLANE)
    if pb0 <= 512:
        tile = pb = pb0                                    # single full-extent block
    else:
        half = _round_up(-(-pb0 // 2), LANE)               # >=2 steps: feed both v7x TCs
        tile = max(LANE, min(_round_up(tile_b, LANE), half))
        pb = _round_up(pb0, tile)
    grid = (pb // tile,)

    # bf16 input, feature dim left un-padded: no 128-lane f32 pad round trip in HBM.
    x_p = x.astype(jnp.bfloat16)
    if pb != batch:
        x_p = jnp.zeros((pb, in_dim), jnp.bfloat16).at[:batch].set(x_p)

    x_spec = pl.BlockSpec((tile, in_dim), lambda i: (i, 0))
    out_spec = pl.BlockSpec((out_rows, tile), lambda i: (0, i))

    def resident(a):
        # Grid-invariant operand: constant index_map keeps it VMEM-resident; single
        # buffering avoids wasted VMEM + per-step buffer rotation.
        return pl.BlockSpec(a.shape, lambda i: (0, 0), pipeline_mode=pl.Buffered(1))

    out_t = pl.pallas_call(
        dqn_kernel,
        out_shape=jax.ShapeDtypeStruct((out_rows, pb), jnp.float32),
        grid=grid,
        in_specs=[
            x_spec,
            resident(w1), resident(b1),
            resident(w2), resident(b2),
            resident(w3t), resident(b3),
        ],
        out_specs=out_spec,
        compiler_params=pltpu.CompilerParams(
            dimension_semantics=("parallel",),
            vmem_limit_bytes=32 * 1024 * 1024),
    )(x_p, w1, b1, w2, b2, w3t, b3)

    # (out_rows, pb) lane-dense slab -> (batch, output_size); tiny XLA transpose.
    return out_t[:output_size, :batch].T


def init_dqn_params(key, input_size, output_size, hidden=64):
    """PyTorch-style uniform init.  Hidden/out dims zero-padded for the kernel,
    weights stored in bf16, fc3 stored transposed."""
    ks = jax.random.split(key, 6)
    hid_p = _round_up(hidden, LANE)                 # 64 -> 128 lanes
    out_rows = _round_up(output_size, SUBLANE)      # 4  -> 8 sublanes (transposed fc3)

    def linear(kw, kb, fan_in, fan_out):
        bound = float(fan_in) ** -0.5
        w = jax.random.uniform(kw, (fan_in, fan_out), jnp.float32, -bound, bound)
        b = jax.random.uniform(kb, (fan_out,), jnp.float32, -bound, bound)
        return w, b

    w1, b1 = linear(ks[0], ks[1], input_size, hidden)
    w2, b2 = linear(ks[2], ks[3], hidden, hidden)
    w3, b3 = linear(ks[4], ks[5], hidden, output_size)

    # Zero padding is exact: padded lanes stay 0 through ReLU and contribute nothing.
    # The input feature dim is intentionally NOT padded (small-K MXU matmul) so x
    # never has to be lane-padded in HBM.
    w1_p = jnp.zeros((input_size, hid_p), jnp.float32).at[:, :hidden].set(w1)
    b1_p = jnp.zeros((1, hid_p), jnp.float32).at[0, :hidden].set(b1)
    w2_p = jnp.zeros((hid_p, hid_p), jnp.float32).at[:hidden, :hidden].set(w2)
    b2_p = jnp.zeros((1, hid_p), jnp.float32).at[0, :hidden].set(b2)
    w3t_p = jnp.zeros((out_rows, hid_p), jnp.float32).at[:output_size, :hidden].set(w3.T)
    b3_p = jnp.zeros((out_rows, 1), jnp.float32).at[:output_size, 0].set(b3)

    return (w1_p.astype(jnp.bfloat16), b1_p,
            w2_p.astype(jnp.bfloat16), b2_p,
            w3t_p.astype(jnp.bfloat16), b3_p)


def dqn_reference(x, params, output_size):
    """Pure-JAX reference mirroring the kernel's bf16 rounding points."""
    w1, b1, w2, b2, w3t, b3 = params
    bf = lambda a: a.astype(jnp.bfloat16).astype(jnp.float32)
    h1 = jnp.maximum(bf(x) @ w1.astype(jnp.float32) + b1, 0.0)
    h2 = jnp.maximum(bf(h1) @ w2.astype(jnp.float32) + b2, 0.0)
    out = bf(h2) @ w3t.astype(jnp.float32).T + b3[:, 0][None, :]
    return out[:, :output_size]


if __name__ == "__main__":
    key = jax.random.PRNGKey(0)
    batch, input_size, output_size = 8, 16, 4

    k_x, k_p = jax.random.split(key)
    x = jax.random.normal(k_x, (batch, input_size), jnp.float32)
    params = init_dqn_params(k_p, input_size, output_size)

    out = dqn_forward(x, params, output_size)
    out = jax.block_until_ready(out)

    ref = dqn_reference(x, params, output_size)
    assert out.shape == (batch, output_size)
    assert jnp.allclose(out, ref, atol=1e-3, rtol=1e-3), float(
        jnp.max(jnp.abs(out - ref)))

    print("KERNEL_OK")
</pallas_src>

<mosaic_0001>
module attributes {stable_mosaic.version = 11 : i64} {
  func.func @dqn_kernel(%arg0: i32, %arg1: memref<8x16xbf16, #tpu.memory_space<vmem>>, %arg2: memref<16x128xbf16, #tpu.memory_space<vmem>>, %arg3: memref<1x128xf32, #tpu.memory_space<vmem>>, %arg4: memref<128x128xbf16, #tpu.memory_space<vmem>>, %arg5: memref<1x128xf32, #tpu.memory_space<vmem>>, %arg6: memref<8x128xbf16, #tpu.memory_space<vmem>>, %arg7: memref<8x1xf32, #tpu.memory_space<vmem>>, %arg8: memref<8x8xf32, #tpu.memory_space<vmem>>) attributes {dimension_semantics = [#tpu.dimension_semantics<parallel>], iteration_bounds = array<i64: 1>, scalar_prefetch = 0 : i64, scratch_operands = 0 : i64, tpu.core_type = #tpu.core_type<tc>, window_params = [{transform_indices = @transform_0, window_bounds = array<i64: 8, 16>}, {pipeline_mode = #tpu.pipeline_mode<synchronous>, transform_indices = @transform_1, window_bounds = array<i64: 16, 128>}, {pipeline_mode = #tpu.pipeline_mode<synchronous>, transform_indices = @transform_2, window_bounds = array<i64: 1, 128>}, {pipeline_mode = #tpu.pipeline_mode<synchronous>, transform_indices = @transform_3, window_bounds = array<i64: 128, 128>}, {pipeline_mode = #tpu.pipeline_mode<synchronous>, transform_indices = @transform_4, window_bounds = array<i64: 1, 128>}, {pipeline_mode = #tpu.pipeline_mode<synchronous>, transform_indices = @transform_5, window_bounds = array<i64: 8, 128>}, {pipeline_mode = #tpu.pipeline_mode<synchronous>, transform_indices = @transform_6, window_bounds = array<i64: 8, 1>}, {transform_indices = @transform_7, window_bounds = array<i64: 8, 8>}]} {
    %c0 = arith.constant 0 : index
    %c0_0 = arith.constant 0 : index
    %0 = vector.load %arg1[%c0, %c0_0] : memref<8x16xbf16, #tpu.memory_space<vmem>>, vector<8x16xbf16>
    %c0_1 = arith.constant 0 : index
    %c0_2 = arith.constant 0 : index
    %1 = vector.load %arg2[%c0_1, %c0_2] : memref<16x128xbf16, #tpu.memory_space<vmem>>, vector<16x128xbf16>
    %cst = arith.constant dense<0.000000e+00> : vector<8x128xf32>
    %2 = tpu.matmul %0, %1, %cst {dimension_numbers = #tpu.dot_dimension_numbers<[1], [0], [0], [1], [0, 0, 1, 1], [], []>} : vector<8x16xbf16>, vector<16x128xbf16>, vector<8x128xf32> -> vector<8x128xf32>
    %c0_3 = arith.constant 0 : index
    %c0_4 = arith.constant 0 : index
    %3 = vector.load %arg3[%c0_3, %c0_4] : memref<1x128xf32, #tpu.memory_space<vmem>>, vector<1x128xf32>
    %4 = vector.broadcast %3 : vector<1x128xf32> to vector<8x128xf32>
    %5 = arith.addf %2, %4 : vector<8x128xf32>
    %cst_5 = arith.constant 0.000000e+00 : f32
    %6 = vector.broadcast %cst_5 : f32 to vector<8x128xf32>
    %7 = arith.maximumf %5, %6 : vector<8x128xf32>
    %8 = arith.truncf %7 : vector<8x128xf32> to vector<8x128xbf16>
    %c0_6 = arith.constant 0 : index
    %c0_7 = arith.constant 0 : index
    %9 = vector.load %arg4[%c0_6, %c0_7] : memref<128x128xbf16, #tpu.memory_space<vmem>>, vector<128x128xbf16>
    %cst_8 = arith.constant dense<0.000000e+00> : vector<8x128xf32>
    %10 = tpu.matmul %8, %9, %cst_8 {dimension_numbers = #tpu.dot_dimension_numbers<[1], [0], [0], [1], [0, 0, 1, 1], [], []>} : vector<8x128xbf16>, vector<128x128xbf16>, vector<8x128xf32> -> vector<8x128xf32>
    %c0_9 = arith.constant 0 : index
    %c0_10 = arith.constant 0 : index
    %11 = vector.load %arg5[%c0_9, %c0_10] : memref<1x128xf32, #tpu.memory_space<vmem>>, vector<1x128xf32>
    %12 = vector.broadcast %11 : vector<1x128xf32> to vector<8x128xf32>
    %13 = arith.addf %10, %12 : vector<8x128xf32>
    %cst_11 = arith.constant 0.000000e+00 : f32
    %14 = vector.broadcast %cst_11 : f32 to vector<8x128xf32>
    %15 = arith.maximumf %13, %14 : vector<8x128xf32>
    %c0_12 = arith.constant 0 : index
    %c0_13 = arith.constant 0 : index
    %16 = vector.load %arg6[%c0_12, %c0_13] : memref<8x128xbf16, #tpu.memory_space<vmem>>, vector<8x128xbf16>
    %17 = arith.truncf %15 : vector<8x128xf32> to vector<8x128xbf16>
    %cst_14 = arith.constant dense<0.000000e+00> : vector<8x8xf32>
    %18 = tpu.matmul %16, %17, %cst_14 {dimension_numbers = #tpu.dot_dimension_numbers<[1], [1], [0], [0], [0, 0, 1, 0], [], []>} : vector<8x128xbf16>, vector<8x128xbf16>, vector<8x8xf32> -> vector<8x8xf32>
    %c0_15 = arith.constant 0 : index
    %c0_16 = arith.constant 0 : index
    %19 = vector.load %arg7[%c0_15, %c0_16] : memref<8x1xf32, #tpu.memory_space<vmem>>, vector<8x1xf32>
    %20 = vector.broadcast %19 : vector<8x1xf32> to vector<8x8xf32>
    %21 = arith.addf %18, %20 : vector<8x8xf32>
    %c0_17 = arith.constant 0 : index
    %c0_18 = arith.constant 0 : index
    %22 = vector.load %arg8[%c0_17, %c0_18] : memref<8x8xf32, #tpu.memory_space<vmem>>, vector<8x8xf32>
    tpu.vector_store %arg8[%c0_17, %c0_18], %21 {strides = array<i32>} : memref<8x8xf32, #tpu.memory_space<vmem>>, vector<8x8xf32>,
    return
  }
  func.func @transform_0(%arg0: i32) -> (i32, i32) {
    %c0_i32 = arith.constant 0 : i32
    %c0_i32_0 = arith.constant 0 : i32
    return %arg0, %c0_i32 : i32, i32
  }
  func.func @transform_1(%arg0: i32) -> (i32, i32) {
    %c0_i32 = arith.constant 0 : i32
    %c0_i32_0 = arith.constant 0 : i32
    %c0_i32_1 = arith.constant 0 : i32
    return %c0_i32, %c0_i32_0 : i32, i32
  }
  func.func @transform_2(%arg0: i32) -> (i32, i32) {
    %c0_i32 = arith.constant 0 : i32
    %c0_i32_0 = arith.constant 0 : i32
    %c0_i32_1 = arith.constant 0 : i32
    return %c0_i32, %c0_i32_0 : i32, i32
  }
  func.func @transform_3(%arg0: i32) -> (i32, i32) {
    %c0_i32 = arith.constant 0 : i32
    %c0_i32_0 = arith.constant 0 : i32
    %c0_i32_1 = arith.constant 0 : i32
    return %c0_i32, %c0_i32_0 : i32, i32
  }
  func.func @transform_4(%arg0: i32) -> (i32, i32) {
    %c0_i32 = arith.constant 0 : i32
    %c0_i32_0 = arith.constant 0 : i32
    %c0_i32_1 = arith.constant 0 : i32
    return %c0_i32, %c0_i32_0 : i32, i32
  }
  func.func @transform_5(%arg0: i32) -> (i32, i32) {
    %c0_i32 = arith.constant 0 : i32
    %c0_i32_0 = arith.constant 0 : i32
    %c0_i32_1 = arith.constant 0 : i32
    return %c0_i32, %c0_i32_0 : i32, i32
  }
  func.func @transform_6(%arg0: i32) -> (i32, i32) {
    %c0_i32 = arith.constant 0 : i32
    %c0_i32_0 = arith.constant 0 : i32
    %c0_i32_1 = arith.constant 0 : i32
    return %c0_i32, %c0_i32_0 : i32, i32
  }
  func.func @transform_7(%arg0: i32) -> (i32, i32) {
    %c0_i32 = arith.constant 0 : i32
    %c0_i32_0 = arith.constant 0 : i32
    return %c0_i32, %arg0 : i32, i32
  }
}

</mosaic_0001>

<llo_original>
// kernel: tpu_custom_call.1
$region0: #{tpu_custom_call.1}
  #allocation0 [shape = 'u32[]', space=smem, size = 0x4, offset = 0x4, fixed_abs, tag = 'smem constant byte address 0x4 - core index']
  #allocation1 [shape = 'u32[144,128]{1,0:T(1,128)}', space=vmem, size = 0x12000, scoped, tag = 'internal scratch']
  %s0 = inlined_call_operand.hbm [shape: bf16[8,16], index: 0, kind: input, shape index: {}]
  %s1 = inlined_call_operand.vmem [shape: bf16[16,128], index: 1, kind: input, shape index: {}]
  %s2 = inlined_call_operand.hbm [shape: f32[1,128], index: 2, kind: input, shape index: {}]
  %s3 = inlined_call_operand.hbm [shape: bf16[128,128], index: 3, kind: input, shape index: {}]
  %s4 = inlined_call_operand.vmem [shape: f32[1,128], index: 4, kind: input, shape index: {}]
  %s5 = inlined_call_operand.vmem [shape: bf16[8,128], index: 5, kind: input, shape index: {}]
  %s6 = inlined_call_operand.vmem [shape: f32[8,1], index: 6, kind: input, shape index: {}]
  %s7 = inlined_call_operand.hbm [shape: f32[8,8], index: 7, kind: output, shape index: {}]
  %s8 = sld [smem:[#allocation0]]
  $region50: #{tpu_custom_call.1} parent=0
    _
  %s10 = ssub.s32 1, %s8
  %s11 = scalar_select 0, %s10, %s8
  $region1: #{tpu_custom_call.1} parent=0
    #allocation2 [shape = 'u8[2048]{0}', space=vmem, size = 0x800, scoped, tag = 'input window, operand 0, single buffered']
    #allocation3 [shape = 's32[1]{0}', space=sflag, size = 0x4, scoped, tag = 'scoped memory for tpu_custom_call.1']
    #allocation4 [shape = 's32[1]{0}', space=sflag, size = 0x4, scoped, tag = 'scoped memory for tpu_custom_call.1']
    #allocation5 [shape = 'u8[512]{0}', space=vmem, size = 0x400, scoped, tag = 'input window, operand 2, single buffered']
    #allocation6 [shape = 's32[1]{0}', space=sflag, size = 0x4, scoped, tag = 'scoped memory for tpu_custom_call.1']
    #allocation7 [shape = 'u8[32768]{0}', space=vmem, size = 0x8000, scoped, tag = 'input window, operand 3, single buffered']
    #allocation8 [shape = 'u8[4096]{0}', space=vmem, size = 0x1000, scoped, tag = 'output window, operand 0, single buffered']
    %12 = vsyncpa [#allocation3], 0
    %13 = vsyncpa [#allocation6], 0
    %14 = vsyncpa [#allocation4], 0
    // Predicated region
    $region2: #{tpu_custom_call.1} parent=1 // pred_check
      _
    $region3: #{tpu_custom_call.1} parent=1 // pred_check_branch
      %16 = sbr.rel (0) target = $region5
    $region4: #{tpu_custom_call.1} parent=1 // pred_region
      %s18 = ssub.s32 64, 64
      %19 = vsyncadd [#allocation3], %s18
      %s21 = sshll.u32 [#allocation2], 4
      %s22 = int_to_ptr.vmem [resolvable:$true] %s21
      %24 = dma.hbm_to_vmem [thread:$0]  %s0, 64, %s22, [#allocation3]
    $region5: #{tpu_custom_call.1} parent=1 // pred_fallthru
      _
    // Predicated region
    $region6: #{tpu_custom_call.1} parent=1 // pred_check
      _
    $region7: #{tpu_custom_call.1} parent=1 // pred_check_branch
      %26 = sbr.rel (0) target = $region9
    $region8: #{tpu_custom_call.1} parent=1 // pred_region
      _
    $region9: #{tpu_custom_call.1} parent=1 // pred_fallthru
      _
    // Predicated region
    $region10: #{tpu_custom_call.1} parent=1 // pred_check
      _
    $region11: #{tpu_custom_call.1} parent=1 // pred_check_branch
      %28 = sbr.rel (0) target = $region13
    $region12: #{tpu_custom_call.1} parent=1 // pred_region
      %s30 = ssub.s32 16, 16
      %31 = vsyncadd [#allocation6], %s30
      %s33 = sshll.u32 [#allocation5], 4
      %s34 = int_to_ptr.vmem [resolvable:$true] %s33
      %36 = dma.hbm_to_vmem [thread:$0]  %s2, 16, %s34, [#allocation6]
    $region13: #{tpu_custom_call.1} parent=1 // pred_fallthru
      _
    // Predicated region
    $region14: #{tpu_custom_call.1} parent=1 // pred_check
      _
    $region15: #{tpu_custom_call.1} parent=1 // pred_check_branch
      %38 = sbr.rel (0) target = $region17
    $region16: #{tpu_custom_call.1} parent=1 // pred_region
      %s40 = ssub.s32 1024, 1024
      %41 = vsyncadd [#allocation6], %s40
      %s42 = sshll.u32 [#allocation7], 4
      %s43 = int_to_ptr.vmem [resolvable:$true] %s42
      %48 = dma.hbm_to_vmem [thread:$0]  %s3, 1024, %s43, [#allocation6], 64, 64, 4
    $region17: #{tpu_custom_call.1} parent=1 // pred_fallthru
      _
    // Predicated region
    $region18: #{tpu_custom_call.1} parent=1 // pred_check
      _
    $region19: #{tpu_custom_call.1} parent=1 // pred_check_branch
      %50 = sbr.rel (0) target = $region21
    $region20: #{tpu_custom_call.1} parent=1 // pred_region
      _
    $region21: #{tpu_custom_call.1} parent=1 // pred_fallthru
      _
    // Predicated region
    $region22: #{tpu_custom_call.1} parent=1 // pred_check
      _
    $region23: #{tpu_custom_call.1} parent=1 // pred_check_branch
      %52 = sbr.rel (0) target = $region25
    $region24: #{tpu_custom_call.1} parent=1 // pred_region
      _
    $region25: #{tpu_custom_call.1} parent=1 // pred_fallthru
      _
    // Predicated region
    $region26: #{tpu_custom_call.1} parent=1 // pred_check
      _
    $region27: #{tpu_custom_call.1} parent=1 // pred_check_branch
      %54 = sbr.rel (0) target = $region29
    $region28: #{tpu_custom_call.1} parent=1 // pred_region
      _
    $region29: #{tpu_custom_call.1} parent=1 // pred_fallthru
      _
    // Predicated region
    $region30: #{tpu_custom_call.1} parent=1 // pred_check
      _
    $region31: #{tpu_custom_call.1} parent=1 // pred_check_branch
      %56 = sbr.rel (0) target = $region33
    $region32: #{tpu_custom_call.1} parent=1 // pred_region
      %57 = dma.done [#allocation3], 64
    $region33: #{tpu_custom_call.1} parent=1 // pred_fallthru
      _
    // Predicated region
    $region34: #{tpu_custom_call.1} parent=1 // pred_check
      _
    $region35: #{tpu_custom_call.1} parent=1 // pred_check_branch
      %59 = sbr.rel (0) target = $region37
    $region36: #{tpu_custom_call.1} parent=1 // pred_region
      %60 = dma.done [#allocation6], 16
    $region37: #{tpu_custom_call.1} parent=1 // pred_fallthru
      _
    // Predicated region
    $region38: #{tpu_custom_call.1} parent=1 // pred_check
      _
    $region39: #{tpu_custom_call.1} parent=1 // pred_check_branch
      %62 = sbr.rel (0) target = $region41
    $region40: #{tpu_custom_call.1} parent=1 // pred_region
      %63 = dma.done [#allocation6], 1024
    $region41: #{tpu_custom_call.1} parent=1 // pred_fallthru
      _
    %v65 = vld [vmem:[#allocation2] sm:$0xf]
    %v66 = vld [vmem:[%s1] sm:$0xf]
    %v67 = vld [vmem:[%s1 + $0x4] sm:$0xf]
    %v68 = vld [vmem:[#allocation5] sm:$0x1]
    %v70 = vlaneseq
    %v71 = vshrl.u32 %v70, 7
    %v72 = vsub.s32 0, %v71
    %v73 = vrot.slane %v68, %v72
    %v77 = vunpack.c.l.b16 %v66
    %v78 = vunpack.c.l.b16 %v67
    %v79 = vpack.c.b16 %v78, %v77
    %vm81 = vcmask 130048
    %v83 = vsel %vm81, %v65, 0
    %85 = vmatprep.subr.bf16.mxu0 0
    %86 = vmatpush1.bf16.msra.mxu0 0
    %87 = vmatprep.subr.bf16.mxu0 0
    %88 = vmatpush1.bf16.msra.mxu0 0
    %89 = vmatprep.subr.bf16.mxu0 0
    %90 = vmatpush1.bf16.msra.mxu0 0
    %91 = vmatprep.subr.bf16.mxu0 0
    %92 = vmatpush1.bf16.msra.mxu0 0
    %93 = vmatprep.subr.bf16.mxu0 0
    %94 = vmatpush1.bf16.msra.mxu0 0
    %95 = vmatprep.subr.bf16.mxu0 0
    %96 = vmatpush1.bf16.msra.mxu0 0
    %97 = vmatprep.subr.bf16.mxu0 0
    %98 = vmatpush1.bf16.msra.mxu0 0
    %99 = vmatprep.subr.bf16.mxu0 0
    %100 = vmatpush1.bf16.msra.mxu0 %v79
    %101 = vmatprep.subr.bf16.mxu0 0
    %102 = vmatpush2.bf16.msra.mxu0 0
    %103 = vmatprep.subr.bf16.mxu0 0
    %104 = vmatpush2.bf16.msra.mxu0 0
    %105 = vmatprep.subr.bf16.mxu0 0
    %106 = vmatpush2.bf16.msra.mxu0 0
    %107 = vmatprep.subr.bf16.mxu0 0
    %108 = vmatpush2.bf16.msra.mxu0 0
    %109 = vmatprep.subr.bf16.mxu0 0
    %110 = vmatpush2.bf16.msra.mxu0 0
    %111 = vmatprep.subr.bf16.mxu0 0
    %112 = vmatpush2.bf16.msra.mxu0 0
    %113 = vmatprep.subr.bf16.mxu0 0
    %114 = vmatpush2.bf16.msra.mxu0 0
    %115 = vmatprep.subr.bf16.mxu0 0
    %116 = vmatpush2.bf16.msra.mxu0 0
    %117 = vmatprep.mubr.bf16.mxu0 0
    %118 = vmatmul.mubr.bf16.gmra.mxu0 %v83
    %v119 = vpop.f32.mrf.mxu0
    %v120 = vadd.f32 %v73, %v119
    %v121 = vpop.f32.mrf.mxu0
    %v122 = vpop.f32.mrf.mxu0
    %v123 = vpop.f32.mrf.mxu0
    %124 = vdwg.mxu0
    %v125 = vmax.f32 %v120, 0.0
    %v126 = vpack.c.bf16 %v125, %v125
    %v127 = vld [vmem:[#allocation7] sm:$0xf]
    %v128 = vld [vmem:[#allocation7 + $0x4] sm:$0xf]
    %v129 = vld [vmem:[#allocation7 + $0x8] sm:$0xf]
    %v130 = vld [vmem:[#allocation7 + $0xc] sm:$0xf]
    %v131 = vld [vmem:[#allocation7 + $0x10] sm:$0xf]
    %v132 = vld [vmem:[#allocation7 + $0x14] sm:$0xf]
    %v133 = vld [vmem:[#allocation7 + $0x18] sm:$0xf]
    %v134 = vld [vmem:[#allocation7 + $0x1c] sm:$0xf]
    %v135 = vld [vmem:[#allocation7 + $0x20] sm:$0xf]
    %v136 = vld [vmem:[#allocation7 + $0x24] sm:$0xf]
    %v137 = vld [vmem:[#allocation7 + $0x28] sm:$0xf]
    %v138 = vld [vmem:[#allocation7 + $0x2c] sm:$0xf]
    %v139 = vld [vmem:[#allocation7 + $0x30] sm:$0xf]
    %v140 = vld [vmem:[#allocation7 + $0x34] sm:$0xf]
    %v141 = vld [vmem:[#allocation7 + $0x38] sm:$0xf]
    %v142 = vld [vmem:[#allocation7 + $0x3c] sm:$0xf]
    %v143 = vld [vmem:[%s4] sm:$0x1]
    %v145 = vlaneseq
    %v146 = vshrl.u32 %v145, 7
    %v147 = vsub.s32 0, %v146
    %v148 = vrot.slane %v143, %v147
    %v166 = vunpack.c.l.b16 %v127
    %v167 = vunpack.c.l.b16 %v128
    %v168 = vunpack.c.l.b16 %v129
    %v169 = vunpack.c.l.b16 %v130
    %v170 = vunpack.c.l.b16 %v131
    %v171 = vunpack.c.l.b16 %v132
    %v172 = vunpack.c.l.b16 %v133
    %v173 = vunpack.c.l.b16 %v134
    %v174 = vunpack.c.l.b16 %v135
    %v175 = vunpack.c.l.b16 %v136
    %v176 = vunpack.c.l.b16 %v137
    %v177 = vunpack.c.l.b16 %v138
    %v178 = vunpack.c.l.b16 %v139
    %v179 = vunpack.c.l.b16 %v140
    %v180 = vunpack.c.l.b16 %v141
    %v181 = vunpack.c.l.b16 %v142
    %v182 = vpack.c.b16 %v167, %v166
    %v183 = vpack.c.b16 %v169, %v168
    %v184 = vpack.c.b16 %v171, %v170
    %v185 = vpack.c.b16 %v173, %v172
    %v186 = vpack.c.b16 %v175, %v174
    %v187 = vpack.c.b16 %v177, %v176
    %v188 = vpack.c.b16 %v179, %v178
    %v189 = vpack.c.b16 %v181, %v180
    %198 = vmatprep.subr.bf16.mxu0 0
    %199 = vmatpush1.bf16.msra.mxu0 %v189
    %200 = vmatprep.subr.bf16.mxu0 0
    %201 = vmatpush1.bf16.msra.mxu0 %v188
    %202 = vmatprep.subr.bf16.mxu0 0
    %203 = vmatpush1.bf16.msra.mxu0 %v187
    %204 = vmatprep.subr.bf16.mxu0 0
    %205 = vmatpush1.bf16.msra.mxu0 %v186
    %206 = vmatprep.subr.bf16.mxu0 0
    %207 = vmatpush1.bf16.msra.mxu0 %v185
    %208 = vmatprep.subr.bf16.mxu0 0
    %209 = vmatpush1.bf16.msra.mxu0 %v184
    %210 = vmatprep.subr.bf16.mxu0 0
    %211 = vmatpush1.bf16.msra.mxu0 %v183
    %212 = vmatprep.subr.bf16.mxu0 0
    %213 = vmatpush1.bf16.msra.mxu0 %v182
    %214 = vmatprep.subr.bf16.mxu0 0
    %215 = vmatpush2.bf16.msra.mxu0 0
    %216 = vmatprep.subr.bf16.mxu0 0
    %217 = vmatpush2.bf16.msra.mxu0 0
    %218 = vmatprep.subr.bf16.mxu0 0
    %219 = vmatpush2.bf16.msra.mxu0 0
    %220 = vmatprep.subr.bf16.mxu0 0
    %221 = vmatpush2.bf16.msra.mxu0 0
    %222 = vmatprep.subr.bf16.mxu0 0
    %223 = vmatpush2.bf16.msra.mxu0 0
    %224 = vmatprep.subr.bf16.mxu0 0
    %225 = vmatpush2.bf16.msra.mxu0 0
    %226 = vmatprep.subr.bf16.mxu0 0
    %227 = vmatpush2.bf16.msra.mxu0 0
    %228 = vmatprep.subr.bf16.mxu0 0
    %229 = vmatpush2.bf16.msra.mxu0 0
    %230 = vmatprep.mubr.bf16.mxu0 0
    %231 = vmatmul.mubr.bf16.gmra.mxu0 %v126
    %v232 = vpop.f32.mrf.mxu0
    %v233 = vadd.f32 %v148, %v232
    %v234 = vpop.f32.mrf.mxu0
    %v235 = vpop.f32.mrf.mxu0
    %v236 = vpop.f32.mrf.mxu0
    %237 = vdwg.mxu0
    %v238 = vmax.f32 %v233, 0.0
    %v239 = vld [vmem:[%s5] sm:$0xf]
    %v240 = vpack.c.bf16 %v238, %v238
    %v241 = vld [vmem:[%s6] sm:$0xff]
    %243 = vset.pattern.permute.xlu0 0
    %244 = vperm.xlu0 %243, %v241
    %v245 = vpop.permute.xlu0 %244
    %247 = vmatprep.subr.bf16.mxu0 0
    %248 = vmatpush1.bf16.xpose.msra.mxu0 0
    %249 = vmatprep.subr.bf16.mxu0 0
    %250 = vmatpush1.bf16.xpose.msra.mxu0 0
    %251 = vmatprep.subr.bf16.mxu0 0
    %252 = vmatpush1.bf16.xpose.msra.mxu0 0
    %253 = vmatprep.subr.bf16.mxu0 0
    %254 = vmatpush1.bf16.xpose.msra.mxu0 0
    %255 = vmatprep.subr.bf16.mxu0 0
    %256 = vmatpush1.bf16.xpose.msra.mxu0 0
    %257 = vmatprep.subr.bf16.mxu0 0
    %258 = vmatpush1.bf16.xpose.msra.mxu0 0
    %259 = vmatprep.subr.bf16.mxu0 0
    %260 = vmatpush1.bf16.xpose.msra.mxu0 0
    %261 = vmatprep.subr.bf16.mxu0 0
    %262 = vmatpush1.bf16.xpose.msra.mxu0 %v240
    %263 = vmatprep.subr.bf16.mxu0 0
    %264 = vmatpush2.bf16.xpose.msra.mxu0 0
    %265 = vmatprep.subr.bf16.mxu0 0
    %266 = vmatpush2.bf16.xpose.msra.mxu0 0
    %267 = vmatprep.subr.bf16.mxu0 0
    %268 = vmatpush2.bf16.xpose.msra.mxu0 0
    %269 = vmatprep.subr.bf16.mxu0 0
    %270 = vmatpush2.bf16.xpose.msra.mxu0 0
    %271 = vmatprep.subr.bf16.mxu0 0
    %272 = vmatpush2.bf16.xpose.msra.mxu0 0
    %273 = vmatprep.subr.bf16.mxu0 0
    %274 = vmatpush2.bf16.xpose.msra.mxu0 0
    %275 = vmatprep.subr.bf16.mxu0 0
    %276 = vmatpush2.bf16.xpose.msra.mxu0 0
    %277 = vmatprep.subr.bf16.mxu0 0
    %278 = vmatpush2.bf16.xpose.msra.mxu0 0
    %279 = vmatprep.mubr.bf16.mxu0 0
    %280 = vmatmul.mubr.bf16.gmra.mxu0 %v239
    %v281 = vpop.f32.mrf.mxu0
    %v282 = vadd.f32 %v245, %v281
    %v283 = vpop.f32.mrf.mxu0
    %v284 = vpop.f32.mrf.mxu0
    %v285 = vpop.f32.mrf.mxu0
    %286 = vdwg.mxu0
    %vm287 = vcmask 64512
    %288 = vst.msk [vmem:[#allocation8] sm:$0xff] %vm287, %v282
    // Predicated region
    $region42: #{tpu_custom_call.1} parent=1 // pred_check
      _
    $region43: #{tpu_custom_call.1} parent=1 // pred_check_branch
      %290 = sbr.rel (0) target = $region45
    $region44: #{tpu_custom_call.1} parent=1 // pred_region
      %s292 = ssub.s32 128, 128
      %293 = vsyncadd [#allocation4], %s292
      %s295 = sshll.u32 [#allocation8], 4
      %s296 = int_to_ptr.vmem [resolvable:$true] %s295
      %298 = dma.vmem_to_hbm [thread:$0]  %s296, 128, %s7, [#allocation4]
    $region45: #{tpu_custom_call.1} parent=1 // pred_fallthru
      _
    // Predicated region
    $region46: #{tpu_custom_call.1} parent=1 // pred_check
      _
    $region47: #{tpu_custom_call.1} parent=1 // pred_check_branch
      %300 = sbr.rel (0) target = $region49
    $region48: #{tpu_custom_call.1} parent=1 // pred_region
      %301 = dma.done [#allocation4], 128
    $region49: #{tpu_custom_call.1} parent=1 // pred_fallthru
      _
    %302 = vsyncpa [#allocation3], 1
    %303 = vsyncpa [#allocation6], 1
    %304 = vsyncpa [#allocation4], 1

</llo_original>
